<compile_context>
chip_gen: v6e
topology: v6e:2x2x1
jax: 0.10.0
libtpu: 0.0.40
codegen_flags: <defaults>
</compile_context>

<pallas_src>
import jax
import jax.numpy as jnp
from jax.experimental import pallas as pl
from jax.experimental.pallas import tpu as pltpu


_EPS = 1e-5


# ----------------------------------------------------------------------------- kernels

def _linear_bn_relu_kernel(x_ref, w_ref, g_ref, bt_ref, o_ref, acc_ref):
    """One (batch, tn) output tile of ReLU(BN(x @ W)); K streamed along grid axis 1."""
    k = pl.program_id(1)

    @pl.when(k == 0)
    def _():
        acc_ref[...] = jnp.zeros_like(acc_ref)

    acc_ref[...] += jnp.dot(x_ref[...], w_ref[...],
                            preferred_element_type=jnp.float32)

    @pl.when(k == pl.num_programs(1) - 1)
    def _():
        h = acc_ref[...]
        # One-pass batch statistics (biased variance == PyTorch training-mode BN).
        mu = jnp.mean(h, axis=0, keepdims=True)
        var = jnp.maximum(jnp.mean(h * h, axis=0, keepdims=True) - mu * mu, 0.0)
        # BN folded into a single scale/shift; rsqrt goes to the EUP slot.
        scale = g_ref[...] * jax.lax.rsqrt(var + _EPS)
        shift = bt_ref[...] - mu * scale
        o_ref[...] = jnp.maximum(h * scale + shift, 0.0).astype(o_ref.dtype)


def _linear_bias_kernel(x_ref, w_ref, b_ref, o_ref, acc_ref):
    """One (batch, tn) output tile of x @ W + b; K streamed along grid axis 1."""
    k = pl.program_id(1)

    @pl.when(k == 0)
    def _():
        acc_ref[...] = jnp.zeros_like(acc_ref)

    acc_ref[...] += jnp.dot(x_ref[...], w_ref[...],
                            preferred_element_type=jnp.float32)

    @pl.when(k == pl.num_programs(1) - 1)
    def _():
        o_ref[...] = (acc_ref[...] + b_ref[...]).astype(o_ref.dtype)


# ----------------------------------------------------------------------------- wrappers

def _tiled_call(kernel, x, w, vecs, out_dtype, tn, tk):
    """Grid over (output-feature tiles, K tiles); full batch resident per block."""
    N, K = x.shape
    D = w.shape[1]
    grid = (D // tn, K // tk)
    vec_specs = [pl.BlockSpec((1, tn), lambda j, k: (0, j)) for _ in vecs]
    return pl.pallas_call(
        kernel,
        out_shape=jax.ShapeDtypeStruct((N, D), out_dtype),
        grid_spec=pltpu.PrefetchScalarGridSpec(
            num_scalar_prefetch=0,
            grid=grid,
            in_specs=[pl.BlockSpec((N, tk), lambda j, k: (0, k)),
                      pl.BlockSpec((tk, tn), lambda j, k: (k, j))] + vec_specs,
            out_specs=pl.BlockSpec((N, tn), lambda j, k: (0, j)),
            scratch_shapes=[pltpu.VMEM((N, tn), jnp.float32)],
        ),
        compiler_params=pltpu.CompilerParams(
            # feature tiles shard across TensorCores (v7x); K is the reduction axis.
            dimension_semantics=("parallel", "arbitrary")),
    )(x, w, *vecs)


def _round_up(x, m):
    return (x + m - 1) // m * m


def _pick_tile(dim, preferred):
    # dim is a multiple of 128; largest multiple-of-128 tile <= preferred that divides dim.
    t = min(preferred, dim)
    while dim % t:
        t -= 128
    return t


def _pad_cols(a, cols):
    return jnp.pad(a, [(0, 0)] * (a.ndim - 1) + [(0, cols - a.shape[-1])])


def _pad_mat(w, rows, cols):
    return jnp.pad(w, ((0, rows - w.shape[0]), (0, cols - w.shape[1])))


def vicreg_head(x, params, *, tn=256, tk=256):
    """Forward pass of VICRegHead.  x: (N, in_dim) f32 -> (N, out_dim) f32.

    b1/b2 exist in `params` (module fidelity) but are never loaded by the kernels:
    BatchNorm's mean subtraction cancels any pre-BN constant exactly.
    """
    N, in_dim = x.shape
    hid = params["w1"].shape[1]
    out_dim = params["w3"].shape[1]

    in_p, hid_p, out_p = (_round_up(d, 128) for d in (in_dim, hid, out_dim))
    tk_in = _pick_tile(in_p, tk)
    tk_h = _pick_tile(hid_p, tk)
    tn_h = _pick_tile(hid_p, tn)
    tn_o = _pick_tile(out_p, tn)

    # bf16 matmul operands (f32 accumulation in-kernel).  Padded weight rows/cols and
    # padded gamma/beta are zero, so padded feature columns stay identically zero.
    x_p = _pad_cols(x, in_p).astype(jnp.bfloat16)
    w1 = _pad_mat(params["w1"], in_p, hid_p).astype(jnp.bfloat16)
    w2 = _pad_mat(params["w2"], hid_p, hid_p).astype(jnp.bfloat16)
    w3 = _pad_mat(params["w3"], hid_p, out_p).astype(jnp.bfloat16)
    g1, bt1 = _pad_cols(params["g1"], hid_p), _pad_cols(params["bt1"], hid_p)
    g2, bt2 = _pad_cols(params["g2"], hid_p), _pad_cols(params["bt2"], hid_p)
    b3 = _pad_cols(params["b3"], out_p)

    h1 = _tiled_call(_linear_bn_relu_kernel, x_p, w1, (g1, bt1), jnp.bfloat16, tn_h, tk_in)
    h2 = _tiled_call(_linear_bn_relu_kernel, h1, w2, (g2, bt2), jnp.bfloat16, tn_h, tk_h)
    y = _tiled_call(_linear_bias_kernel, h2, w3, (b3,), jnp.float32, tn_o, tk_h)
    return y[:, :out_dim]


# ----------------------------------------------------------------------------- params / refs

def init_params(key, in_dim, hidden_dim, out_dim):
    """Deterministic synthetic init (shapes match nn.Linear / nn.BatchNorm1d)."""
    ks = jax.random.split(key, 6)

    def linear(kw, kb, fan_in, fan_out):
        bound = 1.0 / jnp.sqrt(fan_in)
        w = jax.random.uniform(kw, (fan_in, fan_out), jnp.float32, -bound, bound)
        b = jax.random.uniform(kb, (1, fan_out), jnp.float32, -bound, bound)
        return w, b

    w1, b1 = linear(ks[0], ks[1], in_dim, hidden_dim)
    w2, b2 = linear(ks[2], ks[3], hidden_dim, hidden_dim)
    w3, b3 = linear(ks[4], ks[5], hidden_dim, out_dim)

    return dict(
        w1=w1, b1=b1,
        g1=jnp.ones((1, hidden_dim), jnp.float32),    # BatchNorm1d weight (gamma)
        bt1=jnp.zeros((1, hidden_dim), jnp.float32),  # BatchNorm1d bias (beta)
        w2=w2, b2=b2,
        g2=jnp.ones((1, hidden_dim), jnp.float32),
        bt2=jnp.zeros((1, hidden_dim), jnp.float32),
        w3=w3, b3=b3,
    )


def vicreg_head_ref(x, p):
    """Module-faithful pure-f32 reference (PyTorch training-mode BN)."""
    h = x @ p["w1"] + p["b1"]
    mu = h.mean(0, keepdims=True)
    var = ((h - mu) ** 2).mean(0, keepdims=True)
    h = jnp.maximum((h - mu) / jnp.sqrt(var + _EPS) * p["g1"] + p["bt1"], 0.0)
    h = h @ p["w2"] + p["b2"]
    mu = h.mean(0, keepdims=True)
    var = ((h - mu) ** 2).mean(0, keepdims=True)
    h = jnp.maximum((h - mu) / jnp.sqrt(var + _EPS) * p["g2"] + p["bt2"], 0.0)
    return h @ p["w3"] + p["b3"]


def vicreg_head_ref_bf16(x, p):
    """Reference mirroring the kernel's numerics (bf16 matmuls, f32 accumulation)."""
    def mm(a, w):
        return jnp.dot(a.astype(jnp.bfloat16), w.astype(jnp.bfloat16),
                       preferred_element_type=jnp.float32)

    def bn_relu(h, g, bt):
        mu = jnp.mean(h, axis=0, keepdims=True)
        var = jnp.maximum(jnp.mean(h * h, axis=0, keepdims=True) - mu * mu, 0.0)
        scale = g * jax.lax.rsqrt(var + _EPS)
        shift = bt - mu * scale
        return jnp.maximum(h * scale + shift, 0.0).astype(jnp.bfloat16)

    h = bn_relu(mm(x, p["w1"]), p["g1"], p["bt1"])
    h = bn_relu(mm(h, p["w2"]), p["g2"], p["bt2"])
    return mm(h, p["w3"]) + p["b3"]


# ----------------------------------------------------------------------------- main

if __name__ == "__main__":
    N, IN_DIM, HIDDEN_DIM, OUT_DIM = 8, 32, 32, 16

    key = jax.random.PRNGKey(0)
    kx, kp = jax.random.split(key)
    x = jax.random.normal(kx, (N, IN_DIM), jnp.float32)
    params = init_params(kp, IN_DIM, HIDDEN_DIM, OUT_DIM)

    out = jax.jit(vicreg_head)(x, params)
    out = jax.block_until_ready(out)
    assert out.shape == (N, OUT_DIM)

    # Exact check against a reference with identical numerics (bf16 matmul, f32 acc).
    ref_exact = vicreg_head_ref_bf16(x, params)
    assert jnp.allclose(out, ref_exact, atol=2e-3, rtol=2e-3)

    # Module-faithful f32 reference; looser tolerance bounds the bf16 quantization only.
    ref_f32 = vicreg_head_ref(x, params)
    assert jnp.allclose(out, ref_f32, atol=1e-1, rtol=1e-1)

    print("KERNEL_OK")
</pallas_src>

<mosaic_0001>
module attributes {stable_mosaic.version = 11 : i64} {
  func.func @_linear_bn_relu_kernel(%arg0: i32, %arg1: i32, %arg2: memref<8x128xbf16, #tpu.memory_space<vmem>>, %arg3: memref<128x128xbf16, #tpu.memory_space<vmem>>, %arg4: memref<1x128xf32, #tpu.memory_space<vmem>>, %arg5: memref<1x128xf32, #tpu.memory_space<vmem>>, %arg6: memref<8x128xbf16, #tpu.memory_space<vmem>>, %arg7: memref<8x128xf32, #tpu.memory_space<vmem>>) attributes {dimension_semantics = [#tpu.dimension_semantics<parallel>, #tpu.dimension_semantics<arbitrary>], iteration_bounds = array<i64: 1, 1>, scalar_prefetch = 0 : i64, scratch_operands = 1 : i64, tpu.core_type = #tpu.core_type<tc>, window_params = [{transform_indices = @transform_0, window_bounds = array<i64: 8, 128>}, {transform_indices = @transform_1, window_bounds = array<i64: 128, 128>}, {transform_indices = @transform_2, window_bounds = array<i64: 1, 128>}, {transform_indices = @transform_3, window_bounds = array<i64: 1, 128>}, {transform_indices = @transform_4, window_bounds = array<i64: 8, 128>}]} {
    %c0_i32 = arith.constant 0 : i32
    %0 = arith.cmpi eq, %arg1, %c0_i32 : i32
    %1 = arith.extui %0 : i1 to i32
    %c0_i32_0 = arith.constant 0 : i32
    %2 = arith.cmpi ne, %1, %c0_i32_0 : i32
    scf.if %2 {
      %cst_10 = arith.constant 0.000000e+00 : f32
      %12 = vector.broadcast %cst_10 : f32 to vector<8x128xf32>
      %c0_11 = arith.constant 0 : index
      %c0_12 = arith.constant 0 : index
      %13 = vector.load %arg7[%c0_11, %c0_12] : memref<8x128xf32, #tpu.memory_space<vmem>>, vector<8x128xf32>
      tpu.vector_store %arg7[%c0_11, %c0_12], %12 {strides = array<i32>} : memref<8x128xf32, #tpu.memory_space<vmem>>, vector<8x128xf32>,
    } else {
    }
    %c0 = arith.constant 0 : index
    %c0_1 = arith.constant 0 : index
    %3 = vector.load %arg7[%c0, %c0_1] : memref<8x128xf32, #tpu.memory_space<vmem>>, vector<8x128xf32>
    %c0_2 = arith.constant 0 : index
    %c0_3 = arith.constant 0 : index
    %4 = vector.load %arg2[%c0_2, %c0_3] : memref<8x128xbf16, #tpu.memory_space<vmem>>, vector<8x128xbf16>
    %c0_4 = arith.constant 0 : index
    %c0_5 = arith.constant 0 : index
    %5 = vector.load %arg3[%c0_4, %c0_5] : memref<128x128xbf16, #tpu.memory_space<vmem>>, vector<128x128xbf16>
    %cst = arith.constant dense<0.000000e+00> : vector<8x128xf32>
    %6 = tpu.matmul %4, %5, %cst {dimension_numbers = #tpu.dot_dimension_numbers<[1], [0], [0], [1], [0, 0, 1, 1], [], []>} : vector<8x128xbf16>, vector<128x128xbf16>, vector<8x128xf32> -> vector<8x128xf32>
    %7 = arith.addf %3, %6 : vector<8x128xf32>
    %c0_6 = arith.constant 0 : index
    %c0_7 = arith.constant 0 : index
    %8 = vector.load %arg7[%c0_6, %c0_7] : memref<8x128xf32, #tpu.memory_space<vmem>>, vector<8x128xf32>
    tpu.vector_store %arg7[%c0_6, %c0_7], %7 {strides = array<i32>} : memref<8x128xf32, #tpu.memory_space<vmem>>, vector<8x128xf32>,
    %c0_i32_8 = arith.constant 0 : i32
    %9 = arith.cmpi eq, %arg1, %c0_i32_8 : i32
    %10 = arith.extui %9 : i1 to i32
    %c0_i32_9 = arith.constant 0 : i32
    %11 = arith.cmpi ne, %10, %c0_i32_9 : i32
    scf.if %11 {
      %c0_10 = arith.constant 0 : index
      %c0_11 = arith.constant 0 : index
      %12 = vector.load %arg7[%c0_10, %c0_11] : memref<8x128xf32, #tpu.memory_space<vmem>>, vector<8x128xf32>
      %cst_12 = arith.constant dense<0.000000e+00> : vector<128xf32>
      %13 = vector.multi_reduction <add>, %12, %cst_12 [0] : vector<8x128xf32> to vector<128xf32>
      %14 = vector.shape_cast %13 : vector<128xf32> to vector<1x128xf32>
      %cst_13 = arith.constant 8.000000e+00 : f32
      %15 = vector.broadcast %cst_13 : f32 to vector<1x128xf32>
      %16 = arith.divf %14, %15 : vector<1x128xf32>
      %17 = arith.mulf %12, %12 : vector<8x128xf32>
      %cst_14 = arith.constant dense<0.000000e+00> : vector<128xf32>
      %18 = vector.multi_reduction <add>, %17, %cst_14 [0] : vector<8x128xf32> to vector<128xf32>
      %19 = vector.shape_cast %18 : vector<128xf32> to vector<1x128xf32>
      %cst_15 = arith.constant 8.000000e+00 : f32
      %20 = vector.broadcast %cst_15 : f32 to vector<1x128xf32>
      %21 = arith.divf %19, %20 : vector<1x128xf32>
      %22 = arith.mulf %16, %16 : vector<1x128xf32>
      %23 = arith.subf %21, %22 : vector<1x128xf32>
      %cst_16 = arith.constant 0.000000e+00 : f32
      %24 = vector.broadcast %cst_16 : f32 to vector<1x128xf32>
      %25 = arith.maximumf %23, %24 : vector<1x128xf32>
      %c0_17 = arith.constant 0 : index
      %c0_18 = arith.constant 0 : index
      %26 = vector.load %arg4[%c0_17, %c0_18] : memref<1x128xf32, #tpu.memory_space<vmem>>, vector<1x128xf32>
      %cst_19 = arith.constant 9.99999974E-6 : f32
      %27 = vector.broadcast %cst_19 : f32 to vector<1x128xf32>
      %28 = arith.addf %25, %27 : vector<1x128xf32>
      %29 = math.rsqrt %28 : vector<1x128xf32>
      %30 = arith.mulf %26, %29 : vector<1x128xf32>
      %c0_20 = arith.constant 0 : index
      %c0_21 = arith.constant 0 : index
      %31 = vector.load %arg5[%c0_20, %c0_21] : memref<1x128xf32, #tpu.memory_space<vmem>>, vector<1x128xf32>
      %32 = arith.mulf %16, %30 : vector<1x128xf32>
      %33 = arith.subf %31, %32 : vector<1x128xf32>
      %34 = vector.broadcast %30 : vector<1x128xf32> to vector<8x128xf32>
      %35 = arith.mulf %12, %34 : vector<8x128xf32>
      %36 = vector.broadcast %33 : vector<1x128xf32> to vector<8x128xf32>
      %37 = arith.addf %35, %36 : vector<8x128xf32>
      %cst_22 = arith.constant 0.000000e+00 : f32
      %38 = vector.broadcast %cst_22 : f32 to vector<8x128xf32>
      %39 = arith.maximumf %37, %38 : vector<8x128xf32>
      %40 = arith.truncf %39 : vector<8x128xf32> to vector<8x128xbf16>
      %c0_23 = arith.constant 0 : index
      %c0_24 = arith.constant 0 : index
      %41 = vector.load %arg6[%c0_23, %c0_24] : memref<8x128xbf16, #tpu.memory_space<vmem>>, vector<8x128xbf16>
      tpu.vector_store %arg6[%c0_23, %c0_24], %40 {strides = array<i32>} : memref<8x128xbf16, #tpu.memory_space<vmem>>, vector<8x128xbf16>,
    } else {
    }
    return
  }
  func.func @transform_0(%arg0: i32, %arg1: i32) -> (i32, i32) {
    %c0_i32 = arith.constant 0 : i32
    %c0_i32_0 = arith.constant 0 : i32
    return %c0_i32, %arg1 : i32, i32
  }
  func.func @transform_1(%arg0: i32, %arg1: i32) -> (i32, i32) {
    %c0_i32 = arith.constant 0 : i32
    return %arg1, %arg0 : i32, i32
  }
  func.func @transform_2(%arg0: i32, %arg1: i32) -> (i32, i32) {
    %c0_i32 = arith.constant 0 : i32
    %c0_i32_0 = arith.constant 0 : i32
    return %c0_i32, %arg0 : i32, i32
  }
  func.func @transform_3(%arg0: i32, %arg1: i32) -> (i32, i32) {
    %c0_i32 = arith.constant 0 : i32
    %c0_i32_0 = arith.constant 0 : i32
    return %c0_i32, %arg0 : i32, i32
  }
  func.func @transform_4(%arg0: i32, %arg1: i32) -> (i32, i32) {
    %c0_i32 = arith.constant 0 : i32
    %c0_i32_0 = arith.constant 0 : i32
    return %c0_i32, %arg0 : i32, i32
  }
}

module attributes {stable_mosaic.version = 11 : i64} {
  func.func @_linear_bias_kernel(%arg0: i32, %arg1: i32, %arg2: memref<8x128xbf16, #tpu.memory_space<vmem>>, %arg3: memref<128x128xbf16, #tpu.memory_space<vmem>>, %arg4: memref<1x128xf32, #tpu.memory_space<vmem>>, %arg5: memref<8x128xf32, #tpu.memory_space<vmem>>, %arg6: memref<8x128xf32, #tpu.memory_space<vmem>>) attributes {dimension_semantics = [#tpu.dimension_semantics<parallel>, #tpu.dimension_semantics<arbitrary>], iteration_bounds = array<i64: 1, 1>, scalar_prefetch = 0 : i64, scratch_operands = 1 : i64, tpu.core_type = #tpu.core_type<tc>, window_params = [{transform_indices = @transform_0, window_bounds = array<i64: 8, 128>}, {transform_indices = @transform_1, window_bounds = array<i64: 128, 128>}, {transform_indices = @transform_2, window_bounds = array<i64: 1, 128>}, {transform_indices = @transform_3, window_bounds = array<i64: 8, 128>}]} {
    %c0_i32 = arith.constant 0 : i32
    %0 = arith.cmpi eq, %arg1, %c0_i32 : i32
    %1 = arith.extui %0 : i1 to i32
    %c0_i32_0 = arith.constant 0 : i32
    %2 = arith.cmpi ne, %1, %c0_i32_0 : i32
    scf.if %2 {
      %cst_10 = arith.constant 0.000000e+00 : f32
      %12 = vector.broadcast %cst_10 : f32 to vector<8x128xf32>
      %c0_11 = arith.constant 0 : index
      %c0_12 = arith.constant 0 : index
      %13 = vector.load %arg6[%c0_11, %c0_12] : memref<8x128xf32, #tpu.memory_space<vmem>>, vector<8x128xf32>
      tpu.vector_store %arg6[%c0_11, %c0_12], %12 {strides = array<i32>} : memref<8x128xf32, #tpu.memory_space<vmem>>, vector<8x128xf32>,
    } else {
    }
    %c0 = arith.constant 0 : index
    %c0_1 = arith.constant 0 : index
    %3 = vector.load %arg6[%c0, %c0_1] : memref<8x128xf32, #tpu.memory_space<vmem>>, vector<8x128xf32>
    %c0_2 = arith.constant 0 : index
    %c0_3 = arith.constant 0 : index
    %4 = vector.load %arg2[%c0_2, %c0_3] : memref<8x128xbf16, #tpu.memory_space<vmem>>, vector<8x128xbf16>
    %c0_4 = arith.constant 0 : index
    %c0_5 = arith.constant 0 : index
    %5 = vector.load %arg3[%c0_4, %c0_5] : memref<128x128xbf16, #tpu.memory_space<vmem>>, vector<128x128xbf16>
    %cst = arith.constant dense<0.000000e+00> : vector<8x128xf32>
    %6 = tpu.matmul %4, %5, %cst {dimension_numbers = #tpu.dot_dimension_numbers<[1], [0], [0], [1], [0, 0, 1, 1], [], []>} : vector<8x128xbf16>, vector<128x128xbf16>, vector<8x128xf32> -> vector<8x128xf32>
    %7 = arith.addf %3, %6 : vector<8x128xf32>
    %c0_6 = arith.constant 0 : index
    %c0_7 = arith.constant 0 : index
    %8 = vector.load %arg6[%c0_6, %c0_7] : memref<8x128xf32, #tpu.memory_space<vmem>>, vector<8x128xf32>
    tpu.vector_store %arg6[%c0_6, %c0_7], %7 {strides = array<i32>} : memref<8x128xf32, #tpu.memory_space<vmem>>, vector<8x128xf32>,
    %c0_i32_8 = arith.constant 0 : i32
    %9 = arith.cmpi eq, %arg1, %c0_i32_8 : i32
    %10 = arith.extui %9 : i1 to i32
    %c0_i32_9 = arith.constant 0 : i32
    %11 = arith.cmpi ne, %10, %c0_i32_9 : i32
    scf.if %11 {
      %c0_10 = arith.constant 0 : index
      %c0_11 = arith.constant 0 : index
      %12 = vector.load %arg6[%c0_10, %c0_11] : memref<8x128xf32, #tpu.memory_space<vmem>>, vector<8x128xf32>
      %c0_12 = arith.constant 0 : index
      %c0_13 = arith.constant 0 : index
      %13 = vector.load %arg4[%c0_12, %c0_13] : memref<1x128xf32, #tpu.memory_space<vmem>>, vector<1x128xf32>
      %14 = vector.broadcast %13 : vector<1x128xf32> to vector<8x128xf32>
      %15 = arith.addf %12, %14 : vector<8x128xf32>
      %c0_14 = arith.constant 0 : index
      %c0_15 = arith.constant 0 : index
      %16 = vector.load %arg5[%c0_14, %c0_15] : memref<8x128xf32, #tpu.memory_space<vmem>>, vector<8x128xf32>
      tpu.vector_store %arg5[%c0_14, %c0_15], %15 {strides = array<i32>} : memref<8x128xf32, #tpu.memory_space<vmem>>, vector<8x128xf32>,
    } else {
    }
    return
  }
  func.func @transform_0(%arg0: i32, %arg1: i32) -> (i32, i32) {
    %c0_i32 = arith.constant 0 : i32
    %c0_i32_0 = arith.constant 0 : i32
    return %c0_i32, %arg1 : i32, i32
  }
  func.func @transform_1(%arg0: i32, %arg1: i32) -> (i32, i32) {
    %c0_i32 = arith.constant 0 : i32
    return %arg1, %arg0 : i32, i32
  }
  func.func @transform_2(%arg0: i32, %arg1: i32) -> (i32, i32) {
    %c0_i32 = arith.constant 0 : i32
    %c0_i32_0 = arith.constant 0 : i32
    return %c0_i32, %arg0 : i32, i32
  }
  func.func @transform_3(%arg0: i32, %arg1: i32) -> (i32, i32) {
    %c0_i32 = arith.constant 0 : i32
    %c0_i32_0 = arith.constant 0 : i32
    return %c0_i32, %arg0 : i32, i32
  }
}

</mosaic_0001>

<llo_original>
// kernel: vicreg_head.3
$region0: #{vicreg_head.3}
  #allocation0 [shape = 'u32[]', space=smem, size = 0x4, offset = 0x4, fixed_abs, tag = 'smem constant byte address 0x4 - core index']
  #allocation1 [shape = 'u32[144,128]{1,0:T(1,128)}', space=vmem, size = 0x12000, scoped, tag = 'internal scratch']
  #allocation2 [shape = 'f32[8,128]{1,0:T(8,128)}', space=vmem, size = 0x1000, scoped, tag = 'scratch operand']
  %s0 = inlined_call_operand.vmem [shape: bf16[8,128], index: 0, kind: input, shape index: {}]
  %s1 = inlined_call_operand.vmem [shape: bf16[128,128], index: 1, kind: input, shape index: {}]
  %s2 = inlined_call_operand.vmem [shape: f32[1,128], index: 2, kind: input, shape index: {}]
  %s3 = inlined_call_operand.vmem [shape: f32[1,128], index: 3, kind: input, shape index: {}]
  %s4 = inlined_call_operand.vmem [shape: bf16[8,128], index: 4, kind: output, shape index: {}]
  %s5 = sld [smem:[#allocation0]]
  $region34: #{vicreg_head.3} parent=0
    _
  %s7 = ssub.s32 1, %s5
  %s8 = scalar_select 0, %s7, %s5
  // Predicated region
  $region2: #{vicreg_head.3} parent=0 // pred_check
    _
  $region3: #{vicreg_head.3} parent=0 // pred_check_branch
    %10 = sbr.rel (0) target = $region5
  $region4: #{vicreg_head.3} parent=0 // pred_region
    _
  $region5: #{vicreg_head.3} parent=0 // pred_fallthru
    _
  // Predicated region
  $region6: #{vicreg_head.3} parent=0 // pred_check
    _
  $region7: #{vicreg_head.3} parent=0 // pred_check_branch
    %12 = sbr.rel (0) target = $region9
  $region8: #{vicreg_head.3} parent=0 // pred_region
    _
  $region9: #{vicreg_head.3} parent=0 // pred_fallthru
    _
  // Predicated region
  $region10: #{vicreg_head.3} parent=0 // pred_check
    _
  $region11: #{vicreg_head.3} parent=0 // pred_check_branch
    %14 = sbr.rel (0) target = $region13
  $region12: #{vicreg_head.3} parent=0 // pred_region
    _
  $region13: #{vicreg_head.3} parent=0 // pred_fallthru
    _
  // Predicated region
  $region14: #{vicreg_head.3} parent=0 // pred_check
    _
  $region15: #{vicreg_head.3} parent=0 // pred_check_branch
    %16 = sbr.rel (0) target = $region17
  $region16: #{vicreg_head.3} parent=0 // pred_region
    _
  $region17: #{vicreg_head.3} parent=0 // pred_fallthru
    _
  %p18 = scmp.eq.s32.totalorder 0, 0
  // Predicated region
  $region18: #{vicreg_head.3} parent=0 // pred_check
    %p19 = pneg %p18
  $region19: #{vicreg_head.3} parent=0 // pred_check_branch
    %21 = sbr.rel (%p19) target = $region21
  $region20: #{vicreg_head.3} parent=0 // pred_region
    %22 = vst [vmem:[#allocation2] sm:$0xff] 0.0
  $region21: #{vicreg_head.3} parent=0 // pred_fallthru
    _
  %v23 = vld [vmem:[#allocation2] sm:$0xff]
  %v24 = vld [vmem:[%s0] sm:$0xf]
  %v25 = vld [vmem:[%s1] sm:$0xf]
  %v26 = vld [vmem:[%s1 + $0x4] sm:$0xf]
  %v27 = vld [vmem:[%s1 + $0x8] sm:$0xf]
  %v28 = vld [vmem:[%s1 + $0xc] sm:$0xf]
  %v29 = vld [vmem:[%s1 + $0x10] sm:$0xf]
  %v30 = vld [vmem:[%s1 + $0x14] sm:$0xf]
  %v31 = vld [vmem:[%s1 + $0x18] sm:$0xf]
  %v32 = vld [vmem:[%s1 + $0x1c] sm:$0xf]
  %v33 = vld [vmem:[%s1 + $0x20] sm:$0xf]
  %v34 = vld [vmem:[%s1 + $0x24] sm:$0xf]
  %v35 = vld [vmem:[%s1 + $0x28] sm:$0xf]
  %v36 = vld [vmem:[%s1 + $0x2c] sm:$0xf]
  %v37 = vld [vmem:[%s1 + $0x30] sm:$0xf]
  %v38 = vld [vmem:[%s1 + $0x34] sm:$0xf]
  %v39 = vld [vmem:[%s1 + $0x38] sm:$0xf]
  %v40 = vld [vmem:[%s1 + $0x3c] sm:$0xf]
  %v57 = vunpack.c.l.b16 %v25
  %v58 = vunpack.c.l.b16 %v26
  %v59 = vunpack.c.l.b16 %v27
  %v60 = vunpack.c.l.b16 %v28
  %v61 = vunpack.c.l.b16 %v29
  %v62 = vunpack.c.l.b16 %v30
  %v63 = vunpack.c.l.b16 %v31
  %v64 = vunpack.c.l.b16 %v32
  %v65 = vunpack.c.l.b16 %v33
  %v66 = vunpack.c.l.b16 %v34
  %v67 = vunpack.c.l.b16 %v35
  %v68 = vunpack.c.l.b16 %v36
  %v69 = vunpack.c.l.b16 %v37
  %v70 = vunpack.c.l.b16 %v38
  %v71 = vunpack.c.l.b16 %v39
  %v72 = vunpack.c.l.b16 %v40
  %v73 = vpack.c.b16 %v58, %v57
  %v74 = vpack.c.b16 %v60, %v59
  %v75 = vpack.c.b16 %v62, %v61
  %v76 = vpack.c.b16 %v64, %v63
  %v77 = vpack.c.b16 %v66, %v65
  %v78 = vpack.c.b16 %v68, %v67
  %v79 = vpack.c.b16 %v70, %v69
  %v80 = vpack.c.b16 %v72, %v71
  %89 = vmatprep.subr.bf16.mxu0 0
  %90 = vmatpush1.bf16.msra.mxu0 %v80
  %91 = vmatprep.subr.bf16.mxu0 0
  %92 = vmatpush1.bf16.msra.mxu0 %v79
  %93 = vmatprep.subr.bf16.mxu0 0
  %94 = vmatpush1.bf16.msra.mxu0 %v78
  %95 = vmatprep.subr.bf16.mxu0 0
  %96 = vmatpush1.bf16.msra.mxu0 %v77
  %97 = vmatprep.subr.bf16.mxu0 0
  %98 = vmatpush1.bf16.msra.mxu0 %v76
  %99 = vmatprep.subr.bf16.mxu0 0
  %100 = vmatpush1.bf16.msra.mxu0 %v75
  %101 = vmatprep.subr.bf16.mxu0 0
  %102 = vmatpush1.bf16.msra.mxu0 %v74
  %103 = vmatprep.subr.bf16.mxu0 0
  %104 = vmatpush1.bf16.msra.mxu0 %v73
  %105 = vmatprep.subr.bf16.mxu0 0
  %106 = vmatpush2.bf16.msra.mxu0 0
  %107 = vmatprep.subr.bf16.mxu0 0
  %108 = vmatpush2.bf16.msra.mxu0 0
  %109 = vmatprep.subr.bf16.mxu0 0
  %110 = vmatpush2.bf16.msra.mxu0 0
  %111 = vmatprep.subr.bf16.mxu0 0
  %112 = vmatpush2.bf16.msra.mxu0 0
  %113 = vmatprep.subr.bf16.mxu0 0
  %114 = vmatpush2.bf16.msra.mxu0 0
  %115 = vmatprep.subr.bf16.mxu0 0
  %116 = vmatpush2.bf16.msra.mxu0 0
  %117 = vmatprep.subr.bf16.mxu0 0
  %118 = vmatpush2.bf16.msra.mxu0 0
  %119 = vmatprep.subr.bf16.mxu0 0
  %120 = vmatpush2.bf16.msra.mxu0 0
  %121 = vmatprep.mubr.bf16.mxu0 0
  %122 = vmatmul.mubr.bf16.gmra.mxu0 %v24
  %v123 = vpop.f32.mrf.mxu0
  %v124 = vadd.f32 0.0, %v123
  %v125 = vpop.f32.mrf.mxu0
  %v126 = vpop.f32.mrf.mxu0
  %v127 = vpop.f32.mrf.mxu0
  %128 = vdwg.mxu0
  %v129 = vadd.f32 %v23, %v124
  %130 = vst [vmem:[#allocation2] sm:$0xff] %v129
  // Predicated region
  $region22: #{vicreg_head.3} parent=0 // pred_check
    %p131 = pneg %p18
  $region23: #{vicreg_head.3} parent=0 // pred_check_branch
    %133 = sbr.rel (%p131) target = $region25
  $region24: #{vicreg_head.3} parent=0 // pred_region
    %v134 = vld [vmem:[#allocation2] sm:$0xff]
    %v135 = vrot.slane %v134, 4
    %v136 = vadd.f32 %v134, %v135
    %v137 = vrot.slane %v136, 2
    %v138 = vadd.f32 %v136, %v137
    %v139 = vrot.slane %v138, 1
    %v140 = vadd.f32 %v138, %v139
    %v141 = vrcp.pop 8.0
    %v142 = vmul.f32 %v140, %v141
    %v143 = vmul.f32 %v134, %v134
    %v144 = vrot.slane %v143, 4
    %v145 = vadd.f32 %v143, %v144
    %v146 = vrot.slane %v145, 2
    %v147 = vadd.f32 %v145, %v146
    %v148 = vrot.slane %v147, 1
    %v149 = vadd.f32 %v147, %v148
    %v150 = vmul.f32 %v149, %v141
    %v151 = vmul.f32 %v142, %v142
    %v152 = vsub.f32 %v150, %v151
    %v153 = vmax.f32 %v152, 0.0
    %v154 = vld [vmem:[%s2] sm:$0x1]
    %v155 = vadd.f32 %v153, 1e-05
    %v156 = vrsqrt.pop %v155
    %v157 = vmul.f32 %v154, %v156
    %v158 = vld [vmem:[%s3] sm:$0x1]
    %v159 = vmul.f32 %v142, %v157
    %v160 = vsub.f32 %v158, %v159
    %v162 = vlaneseq
    %v163 = vshrl.u32 %v162, 7
    %v164 = vsub.s32 0, %v163
    %v165 = vrot.slane %v157, %v164
    %v167 = vmul.f32 %v134, %v165
    %v169 = vlaneseq
    %v170 = vshrl.u32 %v169, 7
    %v171 = vsub.s32 0, %v170
    %v172 = vrot.slane %v160, %v171
    %v174 = vadd.f32 %v167, %v172
    %v175 = vmax.f32 %v174, 0.0
    %v176 = vpack.c.bf16 %v175, %v175
    %177 = vst [vmem:[%s4] sm:$0xf] %v176
  $region25: #{vicreg_head.3} parent=0 // pred_fallthru
    _
  // Predicated region
  $region26: #{vicreg_head.3} parent=0 // pred_check
    _
  $region27: #{vicreg_head.3} parent=0 // pred_check_branch
    %179 = sbr.rel (0) target = $region29
  $region28: #{vicreg_head.3} parent=0 // pred_region
    _
  $region29: #{vicreg_head.3} parent=0 // pred_fallthru
    _
  // Predicated region
  $region30: #{vicreg_head.3} parent=0 // pred_check
    _
  $region31: #{vicreg_head.3} parent=0 // pred_check_branch
    %181 = sbr.rel (0) target = $region33
  $region32: #{vicreg_head.3} parent=0 // pred_region
    _
  $region33: #{vicreg_head.3} parent=0 // pred_fallthru
    _

// kernel: vicreg_head.5
$region0: #{vicreg_head.5}
  #allocation0 [shape = 'u32[]', space=smem, size = 0x4, offset = 0x4, fixed_abs, tag = 'smem constant byte address 0x4 - core index']
  #allocation1 [shape = 'u32[144,128]{1,0:T(1,128)}', space=vmem, size = 0x12000, scoped, tag = 'internal scratch']
  #allocation2 [shape = 'f32[8,128]{1,0:T(8,128)}', space=vmem, size = 0x1000, scoped, tag = 'scratch operand']
  %s0 = inlined_call_operand.vmem [shape: bf16[8,128], index: 0, kind: input, shape index: {}]
  %s1 = inlined_call_operand.vmem [shape: bf16[128,128], index: 1, kind: input, shape index: {}]
  %s2 = inlined_call_operand.vmem [shape: f32[1,128], index: 2, kind: input, shape index: {}]
  %s3 = inlined_call_operand.hbm [shape: f32[8,128], index: 3, kind: output, shape index: {}]
  %s4 = sld [smem:[#allocation0]]
  $region30: #{vicreg_head.5} parent=0
    _
  %s6 = ssub.s32 1, %s4
  %s7 = scalar_select 0, %s6, %s4
  $region1: #{vicreg_head.5} parent=0
    #allocation3 [shape = 'u8[4096]{0}', space=vmem, size = 0x1000, scoped, tag = 'output window, operand 0, single buffered']
    #allocation4 [shape = 's32[1]{0}', space=sflag, size = 0x4, scoped, tag = 'scoped memory for vicreg_head.5']
    %8 = vsyncpa [#allocation4], 0
    // Predicated region
    $region2: #{vicreg_head.5} parent=1 // pred_check
      _
    $region3: #{vicreg_head.5} parent=1 // pred_check_branch
      %10 = sbr.rel (0) target = $region5
    $region4: #{vicreg_head.5} parent=1 // pred_region
      _
    $region5: #{vicreg_head.5} parent=1 // pred_fallthru
      _
    // Predicated region
    $region6: #{vicreg_head.5} parent=1 // pred_check
      _
    $region7: #{vicreg_head.5} parent=1 // pred_check_branch
      %12 = sbr.rel (0) target = $region9
    $region8: #{vicreg_head.5} parent=1 // pred_region
      _
    $region9: #{vicreg_head.5} parent=1 // pred_fallthru
      _
    // Predicated region
    $region10: #{vicreg_head.5} parent=1 // pred_check
      _
    $region11: #{vicreg_head.5} parent=1 // pred_check_branch
      %14 = sbr.rel (0) target = $region13
    $region12: #{vicreg_head.5} parent=1 // pred_region
      _
    $region13: #{vicreg_head.5} parent=1 // pred_fallthru
      _
    %p16 = scmp.eq.s32.totalorder 0, 0
    // Predicated region
    $region14: #{vicreg_head.5} parent=1 // pred_check
      %p17 = pneg %p16
    $region15: #{vicreg_head.5} parent=1 // pred_check_branch
      %19 = sbr.rel (%p17) target = $region17
    $region16: #{vicreg_head.5} parent=1 // pred_region
      %20 = vst [vmem:[#allocation2] sm:$0xff] 0.0
    $region17: #{vicreg_head.5} parent=1 // pred_fallthru
      _
    %v21 = vld [vmem:[#allocation2] sm:$0xff]
    %v22 = vld [vmem:[%s0] sm:$0xf]
    %v23 = vld [vmem:[%s1] sm:$0xf]
    %v24 = vld [vmem:[%s1 + $0x4] sm:$0xf]
    %v25 = vld [vmem:[%s1 + $0x8] sm:$0xf]
    %v26 = vld [vmem:[%s1 + $0xc] sm:$0xf]
    %v27 = vld [vmem:[%s1 + $0x10] sm:$0xf]
    %v28 = vld [vmem:[%s1 + $0x14] sm:$0xf]
    %v29 = vld [vmem:[%s1 + $0x18] sm:$0xf]
    %v30 = vld [vmem:[%s1 + $0x1c] sm:$0xf]
    %v31 = vld [vmem:[%s1 + $0x20] sm:$0xf]
    %v32 = vld [vmem:[%s1 + $0x24] sm:$0xf]
    %v33 = vld [vmem:[%s1 + $0x28] sm:$0xf]
    %v34 = vld [vmem:[%s1 + $0x2c] sm:$0xf]
    %v35 = vld [vmem:[%s1 + $0x30] sm:$0xf]
    %v36 = vld [vmem:[%s1 + $0x34] sm:$0xf]
    %v37 = vld [vmem:[%s1 + $0x38] sm:$0xf]
    %v38 = vld [vmem:[%s1 + $0x3c] sm:$0xf]
    %v55 = vunpack.c.l.b16 %v23
    %v56 = vunpack.c.l.b16 %v24
    %v57 = vunpack.c.l.b16 %v25
    %v58 = vunpack.c.l.b16 %v26
    %v59 = vunpack.c.l.b16 %v27
    %v60 = vunpack.c.l.b16 %v28
    %v61 = vunpack.c.l.b16 %v29
    %v62 = vunpack.c.l.b16 %v30
    %v63 = vunpack.c.l.b16 %v31
    %v64 = vunpack.c.l.b16 %v32
    %v65 = vunpack.c.l.b16 %v33
    %v66 = vunpack.c.l.b16 %v34
    %v67 = vunpack.c.l.b16 %v35
    %v68 = vunpack.c.l.b16 %v36
    %v69 = vunpack.c.l.b16 %v37
    %v70 = vunpack.c.l.b16 %v38
    %v71 = vpack.c.b16 %v56, %v55
    %v72 = vpack.c.b16 %v58, %v57
    %v73 = vpack.c.b16 %v60, %v59
    %v74 = vpack.c.b16 %v62, %v61
    %v75 = vpack.c.b16 %v64, %v63
    %v76 = vpack.c.b16 %v66, %v65
    %v77 = vpack.c.b16 %v68, %v67
    %v78 = vpack.c.b16 %v70, %v69
    %87 = vmatprep.subr.bf16.mxu0 0
    %88 = vmatpush1.bf16.msra.mxu0 %v78
    %89 = vmatprep.subr.bf16.mxu0 0
    %90 = vmatpush1.bf16.msra.mxu0 %v77
    %91 = vmatprep.subr.bf16.mxu0 0
    %92 = vmatpush1.bf16.msra.mxu0 %v76
    %93 = vmatprep.subr.bf16.mxu0 0
    %94 = vmatpush1.bf16.msra.mxu0 %v75
    %95 = vmatprep.subr.bf16.mxu0 0
    %96 = vmatpush1.bf16.msra.mxu0 %v74
    %97 = vmatprep.subr.bf16.mxu0 0
    %98 = vmatpush1.bf16.msra.mxu0 %v73
    %99 = vmatprep.subr.bf16.mxu0 0
    %100 = vmatpush1.bf16.msra.mxu0 %v72
    %101 = vmatprep.subr.bf16.mxu0 0
    %102 = vmatpush1.bf16.msra.mxu0 %v71
    %103 = vmatprep.subr.bf16.mxu0 0
    %104 = vmatpush2.bf16.msra.mxu0 0
    %105 = vmatprep.subr.bf16.mxu0 0
    %106 = vmatpush2.bf16.msra.mxu0 0
    %107 = vmatprep.subr.bf16.mxu0 0
    %108 = vmatpush2.bf16.msra.mxu0 0
    %109 = vmatprep.subr.bf16.mxu0 0
    %110 = vmatpush2.bf16.msra.mxu0 0
    %111 = vmatprep.subr.bf16.mxu0 0
    %112 = vmatpush2.bf16.msra.mxu0 0
    %113 = vmatprep.subr.bf16.mxu0 0
    %114 = vmatpush2.bf16.msra.mxu0 0
    %115 = vmatprep.subr.bf16.mxu0 0
    %116 = vmatpush2.bf16.msra.mxu0 0
    %117 = vmatprep.subr.bf16.mxu0 0
    %118 = vmatpush2.bf16.msra.mxu0 0
    %119 = vmatprep.mubr.bf16.mxu0 0
    %120 = vmatmul.mubr.bf16.gmra.mxu0 %v22
    %v121 = vpop.f32.mrf.mxu0
    %v122 = vadd.f32 0.0, %v121
    %v123 = vpop.f32.mrf.mxu0
    %v124 = vpop.f32.mrf.mxu0
    %v125 = vpop.f32.mrf.mxu0
    %126 = vdwg.mxu0
    %v127 = vadd.f32 %v21, %v122
    %128 = vst [vmem:[#allocation2] sm:$0xff] %v127
    // Predicated region
    $region18: #{vicreg_head.5} parent=1 // pred_check
      %p129 = pneg %p16
    $region19: #{vicreg_head.5} parent=1 // pred_check_branch
      %131 = sbr.rel (%p129) target = $region21
    $region20: #{vicreg_head.5} parent=1 // pred_region
      %v132 = vld [vmem:[#allocation2] sm:$0xff]
      %v133 = vld [vmem:[%s2] sm:$0x1]
      %v135 = vlaneseq
      %v136 = vshrl.u32 %v135, 7
      %v137 = vsub.s32 0, %v136
      %v138 = vrot.slane %v133, %v137
      %v140 = vadd.f32 %v132, %v138
      %141 = vst [vmem:[#allocation3] sm:$0xff] %v140
    $region21: #{vicreg_head.5} parent=1 // pred_fallthru
      _
    // Predicated region
    $region22: #{vicreg_head.5} parent=1 // pred_check
      _
    $region23: #{vicreg_head.5} parent=1 // pred_check_branch
      %143 = sbr.rel (0) target = $region25
    $region24: #{vicreg_head.5} parent=1 // pred_region
      %s145 = ssub.s32 128, 128
      %146 = vsyncadd [#allocation4], %s145
      %s148 = sshll.u32 [#allocation3], 4
      %s149 = int_to_ptr.vmem [resolvable:$true] %s148
      %151 = dma.vmem_to_hbm [thread:$0]  %s149, 128, %s3, [#allocation4]
    $region25: #{vicreg_head.5} parent=1 // pred_fallthru
      _
    // Predicated region
    $region26: #{vicreg_head.5} parent=1 // pred_check
      _
    $region27: #{vicreg_head.5} parent=1 // pred_check_branch
      %153 = sbr.rel (0) target = $region29
    $region28: #{vicreg_head.5} parent=1 // pred_region
      %154 = dma.done [#allocation4], 128
    $region29: #{vicreg_head.5} parent=1 // pred_fallthru
      _
    %155 = vsyncpa [#allocation4], 1

</llo_original>
